<compile_context>
chip_gen: v6e
topology: v6e:2x2x1
jax: 0.10.0
libtpu: 0.0.40
codegen_flags: <defaults>
</compile_context>

<pallas_src>
import math
import functools

import jax
import jax.numpy as jnp
from jax import lax
from jax.experimental import pallas as pl
from jax.experimental.pallas import tpu as pltpu

C = 1.0               # ball curvature (geoopt PoincareBall default c=1)
SQRT_C = math.sqrt(C)
EPS_PROJ = 4e-3       # geoopt float32 projection eps
MIN_NORM = 1e-15
MIN_SQ = MIN_NORM * MIN_NORM


def _round_up(a, m):
    return (a + m - 1) // m * m


def _cdiv(a, b):
    return (a + b - 1) // b


# --------------------------------------------------------------------------
# x-invariant prep (plain jnp, one-shot per call):
#   bias   = proj(expmap0(_weight * _bias))
#   weight = transp0(bias, _weight) = _weight * (1 - c*||bias||^2)
# Returned already transposed: (Din, Dout).
# --------------------------------------------------------------------------
def _transported_weight_t(w_raw, b_raw):
    maxnorm = (1.0 - EPS_PROJ) / SQRT_C
    wb = w_raw * b_raw
    wb_norm = jnp.maximum(jnp.sqrt(jnp.sum(wb * wb, axis=-1, keepdims=True)), MIN_NORM)
    bias = jnp.tanh(SQRT_C * wb_norm) * wb / (SQRT_C * wb_norm)
    b_norm = jnp.maximum(jnp.sqrt(jnp.sum(bias * bias, axis=-1, keepdims=True)), MIN_NORM)
    bias = bias * jnp.minimum(1.0, maxnorm / b_norm)
    factor = jnp.maximum(1.0 - C * jnp.sum(bias * bias, axis=-1, keepdims=True), MIN_NORM)
    return (w_raw * factor).T        # (Din, Dout)


# --------------------------------------------------------------------------
# Hot kernel: mobius_matvec(weight, x) over a tile of rows (MXU + epilogue)
# --------------------------------------------------------------------------
def _mobius_matvec_kernel(x_ref, wt_ref, o_ref):
    x = x_ref[...]            # (TN, Din)      f32
    wt = wt_ref[...]          # (Din, Dout_p)  f32, transported + pre-transposed

    maxnorm = (1.0 - EPS_PROJ) / SQRT_C

    # ||x|| and 1/||x|| via rsqrt (EUP), single clamp on the squared sum
    x_sq = jnp.maximum(jnp.sum(x * x, axis=-1, keepdims=True), MIN_SQ)    # (TN, 1)
    inv_x_norm = lax.rsqrt(x_sq)
    x_norm = x_sq * inv_x_norm

    # MXU matmul, canonical contraction (no per-step weight relayout)
    mx = jnp.dot(x, wt, preferred_element_type=jnp.float32)               # (TN, Dout_p)

    mx_sq = jnp.sum(mx * mx, axis=-1, keepdims=True)                      # (TN, 1)
    zero_row = mx_sq == 0.0                                               # pre-clamp
    mx_sq_c = jnp.maximum(mx_sq, MIN_SQ)
    inv_mx_norm = lax.rsqrt(mx_sq_c)
    mx_norm = mx_sq_c * inv_mx_norm

    xn = jnp.clip(SQRT_C * x_norm, -1.0 + 1e-7, 1.0 - 1e-7)
    artanh_xn = 0.5 * (jnp.log1p(xn) - jnp.log1p(-xn))                    # artanh(sqrt(c)*||x||)

    scale = jnp.tanh(mx_norm * inv_x_norm * artanh_xn) * (inv_mx_norm / SQRT_C)  # (TN,1), >= 0

    # Ball projection folded into the per-row scalar: since res = scale*mx,
    # ||res||^2 = scale^2 * ||mx||^2, so the projection factor is purely per-row.
    proj = jnp.minimum(
        1.0, maxnorm * lax.rsqrt(jnp.maximum(scale * scale * mx_sq_c, MIN_SQ)))
    total = jnp.where(zero_row, 0.0, scale * proj)                        # (TN, 1)

    o_ref[...] = total * mx       # single full-width multiply in the epilogue
    # NOTE: zero-row detection uses mx_sq == 0 (pre-clamp) vs reference's
    # max|mx| == 0; divergence only for rows that fully underflow to zero.


# --------------------------------------------------------------------------
# Wrapper
# --------------------------------------------------------------------------
def _vmem_params():
    """(working-set budget, vmem_limit cap) -- conservative by generation."""
    try:
        kind = jax.devices()[0].device_kind.lower()
    except Exception:
        kind = ""
    if "v5" in kind or "v6" in kind:
        return 96 << 20, 110 << 20     # 128 MiB physical VMEM
    return 44 << 20, 60 << 20          # v7x: 64 MiB per core; stay well under


@functools.partial(jax.jit, static_argnames=("tile_n",))
def mobius_layer(x, w_raw, b_raw, *, tile_n=512):
    # tile_n=1024 is a reasonable override on v5e/v6e when Din, Dout <= ~1024.
    N, Din = x.shape
    Dout = w_raw.shape[0]

    x = x.astype(jnp.float32)
    w_raw = w_raw.astype(jnp.float32)
    b_raw = b_raw.astype(jnp.float32)

    # One-shot x-invariant prep (fused by XLA), weight already transposed.
    weight_t = _transported_weight_t(w_raw, b_raw)           # (Din, Dout)

    # Lane-dense output: pad Dout to a multiple of 128 (padded weight columns
    # are exact zeros -> padded output columns are exact zeros, sliced off).
    dout_p = _round_up(Dout, 128)
    if dout_p != Dout:
        weight_t = jnp.pad(weight_t, ((0, 0), (0, dout_p - Dout)))

    budget, limit_cap = _vmem_params()
    w_bytes = 4 * Din * dout_p

    # The weight block is grid-constant (index_map returns (0,0) every step);
    # single-buffer it when it is a large VMEM line item.
    w_bufs = 2
    w_spec = pl.BlockSpec((Din, dout_p), lambda i: (0, 0))
    if w_bytes > (4 << 20) and hasattr(pl, "Buffered"):
        try:
            w_spec = pl.BlockSpec((Din, dout_p), lambda i: (0, 0),
                                  pipeline_mode=pl.Buffered(1))
            w_bufs = 1
        except TypeError:
            pass
    # TODO(synk): add a Dout grid axis (column-tiled weight/output) for weights
    # too large to stay resident in VMEM even single-buffered.

    def working_set(t):
        return 4 * (2 * t * Din + 2 * t * dout_p) + w_bufs * w_bytes

    # Row tile: multiple of 8, at least ~4 grid programs (v7x megacore sharding),
    # shrunk until the working set fits the generation-aware VMEM budget.
    tile = max(8, min(tile_n, _round_up(max(_cdiv(N, 4), 1), 8)))
    while tile > 8 and working_set(tile) > budget:
        tile = max(8, _round_up(tile // 2, 8))

    vmem_limit = int(min(limit_cap, max(32 << 20, working_set(tile) + (8 << 20))))

    grid = (_cdiv(N, tile),)   # ragged edge block handled by Pallas (no jnp.pad of x)

    out = pl.pallas_call(
        _mobius_matvec_kernel,
        out_shape=jax.ShapeDtypeStruct((N, dout_p), jnp.float32),
        grid=grid,
        in_specs=[
            pl.BlockSpec((tile, Din), lambda i: (i, 0)),     # x row tile
            w_spec,                                          # resident transported weight
        ],
        out_specs=pl.BlockSpec((tile, dout_p), lambda i: (i, 0)),
        compiler_params=pltpu.CompilerParams(
            dimension_semantics=("parallel",),
            vmem_limit_bytes=vmem_limit),
    )(x, weight_t)

    return out[:, :Dout]


# --------------------------------------------------------------------------
# Pure-JAX reference (same math as the PyTorch module with c=1 PoincareBall)
# --------------------------------------------------------------------------
def mobius_layer_reference(x, w_raw, b_raw):
    maxnorm = (1.0 - EPS_PROJ) / SQRT_C
    wb = w_raw * b_raw
    wb_norm = jnp.maximum(jnp.linalg.norm(wb, axis=-1, keepdims=True), MIN_NORM)
    bias = jnp.tanh(SQRT_C * wb_norm) * wb / (SQRT_C * wb_norm)
    b_norm = jnp.maximum(jnp.linalg.norm(bias, axis=-1, keepdims=True), MIN_NORM)
    bias = jnp.where(b_norm > maxnorm, bias / b_norm * maxnorm, bias)
    weight = w_raw * jnp.maximum(1.0 - C * jnp.sum(bias * bias, -1, keepdims=True), MIN_NORM)

    x_norm = jnp.maximum(jnp.linalg.norm(x, axis=-1, keepdims=True), MIN_NORM)
    mx = x @ weight.T
    mx_norm = jnp.maximum(jnp.linalg.norm(mx, axis=-1, keepdims=True), MIN_NORM)
    xn = jnp.clip(SQRT_C * x_norm, -1.0 + 1e-7, 1.0 - 1e-7)
    res = jnp.tanh(mx_norm / x_norm * jnp.arctanh(xn)) * mx / (mx_norm * SQRT_C)
    res = jnp.where(jnp.max(jnp.abs(mx), -1, keepdims=True) == 0.0, 0.0, res)
    r_norm = jnp.maximum(jnp.linalg.norm(res, axis=-1, keepdims=True), MIN_NORM)
    return jnp.where(r_norm > maxnorm, res / r_norm * maxnorm, res)


if __name__ == "__main__":
    key = jax.random.PRNGKey(0)
    k_x, k_r, k_w, k_b = jax.random.split(key, 4)

    N, Din, Dout = 64, 32, 16

    # Input points inside the Poincare ball (norm < 1).
    raw = jax.random.normal(k_x, (N, Din), dtype=jnp.float32)
    radius = jax.random.uniform(k_r, (N, 1), minval=0.05, maxval=0.9)
    x = raw / jnp.maximum(jnp.linalg.norm(raw, axis=-1, keepdims=True), 1e-6) * radius

    # Deterministic parameter init mimicking RiemannianLayer.reset_parameters:
    #   kaiming_normal_(a=sqrt(5)): std = 1/sqrt(3*fan_in)
    #   uniform_(-4/sqrt(fan_in), 4/sqrt(fan_in)) for _bias (out, 1)
    std = 1.0 / math.sqrt(3.0 * Din)
    w_raw = std * jax.random.normal(k_w, (Dout, Din), dtype=jnp.float32)
    bound = 4.0 / math.sqrt(Din)
    b_raw = jax.random.uniform(k_b, (Dout, 1), minval=-bound, maxval=bound,
                               dtype=jnp.float32)

    out = mobius_layer(x, w_raw, b_raw)
    out = jax.block_until_ready(out)

    ref = mobius_layer_reference(x, w_raw, b_raw)
    assert out.shape == (N, Dout)
    assert jnp.allclose(out, ref, atol=1e-5, rtol=1e-5), "mismatch vs reference"

    print("KERNEL_OK")
</pallas_src>

<mosaic_0001>
module attributes {stable_mosaic.version = 11 : i64} {
  func.func @_mobius_matvec_kernel(%arg0: i32, %arg1: memref<16x32xf32, #tpu.memory_space<vmem>>, %arg2: memref<32x128xf32, #tpu.memory_space<vmem>>, %arg3: memref<16x128xf32, #tpu.memory_space<vmem>>) attributes {dimension_semantics = [#tpu.dimension_semantics<parallel>], iteration_bounds = array<i64: 4>, scalar_prefetch = 0 : i64, scratch_operands = 0 : i64, tpu.core_type = #tpu.core_type<tc>, window_params = [{transform_indices = @transform_0, window_bounds = array<i64: 16, 32>}, {pipeline_mode = #tpu.pipeline_mode<synchronous>, transform_indices = @transform_1, window_bounds = array<i64: 32, 128>}, {transform_indices = @transform_2, window_bounds = array<i64: 16, 128>}]} {
    %c0 = arith.constant 0 : index
    %c0_0 = arith.constant 0 : index
    %0 = vector.load %arg1[%c0, %c0_0] : memref<16x32xf32, #tpu.memory_space<vmem>>, vector<16x32xf32>
    %c0_1 = arith.constant 0 : index
    %c0_2 = arith.constant 0 : index
    %1 = vector.load %arg2[%c0_1, %c0_2] : memref<32x128xf32, #tpu.memory_space<vmem>>, vector<32x128xf32>
    %2 = arith.mulf %0, %0 : vector<16x32xf32>
    %cst = arith.constant dense<0.000000e+00> : vector<16xf32>
    %3 = vector.multi_reduction <add>, %2, %cst [1] : vector<16x32xf32> to vector<16xf32>
    %4 = vector.shape_cast %3 : vector<16xf32> to vector<16x1xf32>
    %cst_3 = arith.constant 1.000000e-30 : f32
    %5 = vector.broadcast %cst_3 : f32 to vector<16x1xf32>
    %6 = arith.maximumf %4, %5 : vector<16x1xf32>
    %7 = math.rsqrt %6 : vector<16x1xf32>
    %8 = arith.mulf %6, %7 : vector<16x1xf32>
    %cst_4 = arith.constant dense<0.000000e+00> : vector<16x128xf32>
    %9 = tpu.matmul %0, %1, %cst_4 {dimension_numbers = #tpu.dot_dimension_numbers<[1], [0], [0], [1], [0, 0, 1, 1], [], []>} : vector<16x32xf32>, vector<32x128xf32>, vector<16x128xf32> -> vector<16x128xf32>
    %10 = arith.mulf %9, %9 : vector<16x128xf32>
    %cst_5 = arith.constant dense<0.000000e+00> : vector<16xf32>
    %11 = vector.multi_reduction <add>, %10, %cst_5 [1] : vector<16x128xf32> to vector<16xf32>
    %12 = vector.shape_cast %11 : vector<16xf32> to vector<16x1xf32>
    %cst_6 = arith.constant 0.000000e+00 : f32
    %13 = vector.broadcast %cst_6 : f32 to vector<16x1xf32>
    %14 = arith.cmpf oeq, %12, %13 : vector<16x1xf32>
    %cst_7 = arith.constant 1.000000e-30 : f32
    %15 = vector.broadcast %cst_7 : f32 to vector<16x1xf32>
    %16 = arith.maximumf %12, %15 : vector<16x1xf32>
    %17 = math.rsqrt %16 : vector<16x1xf32>
    %18 = arith.mulf %16, %17 : vector<16x1xf32>
    %cst_8 = arith.constant 1.000000e+00 : f32
    %19 = vector.broadcast %cst_8 : f32 to vector<16x1xf32>
    %20 = arith.mulf %19, %8 : vector<16x1xf32>
    %cst_9 = arith.constant -0.99999988 : f32
    %cst_10 = arith.constant 0.99999988 : f32
    %21 = vector.broadcast %cst_9 : f32 to vector<16x1xf32>
    %22 = arith.maximumf %21, %20 : vector<16x1xf32>
    %23 = vector.broadcast %cst_10 : f32 to vector<16x1xf32>
    %24 = arith.minimumf %23, %22 : vector<16x1xf32>
    %25 = math.log1p %24 : vector<16x1xf32>
    %cst_11 = arith.constant 0.000000e+00 : f32
    %26 = vector.broadcast %cst_11 : f32 to vector<16x1xf32>
    %27 = arith.subf %26, %24 : vector<16x1xf32>
    %28 = math.log1p %27 : vector<16x1xf32>
    %29 = arith.subf %25, %28 : vector<16x1xf32>
    %cst_12 = arith.constant 5.000000e-01 : f32
    %30 = vector.broadcast %cst_12 : f32 to vector<16x1xf32>
    %31 = arith.mulf %30, %29 : vector<16x1xf32>
    %32 = arith.mulf %18, %7 : vector<16x1xf32>
    %33 = arith.mulf %32, %31 : vector<16x1xf32>
    %34 = math.tanh %33 : vector<16x1xf32>
    %cst_13 = arith.constant 1.000000e+00 : f32
    %35 = vector.broadcast %cst_13 : f32 to vector<16x1xf32>
    %36 = arith.divf %17, %35 : vector<16x1xf32>
    %37 = arith.mulf %34, %36 : vector<16x1xf32>
    %38 = arith.mulf %37, %37 : vector<16x1xf32>
    %39 = arith.mulf %38, %16 : vector<16x1xf32>
    %cst_14 = arith.constant 1.000000e-30 : f32
    %40 = vector.broadcast %cst_14 : f32 to vector<16x1xf32>
    %41 = arith.maximumf %39, %40 : vector<16x1xf32>
    %42 = math.rsqrt %41 : vector<16x1xf32>
    %cst_15 = arith.constant 0.995999991 : f32
    %43 = vector.broadcast %cst_15 : f32 to vector<16x1xf32>
    %44 = arith.mulf %43, %42 : vector<16x1xf32>
    %cst_16 = arith.constant 1.000000e+00 : f32
    %45 = vector.broadcast %cst_16 : f32 to vector<16x1xf32>
    %46 = arith.minimumf %45, %44 : vector<16x1xf32>
    %47 = arith.mulf %37, %46 : vector<16x1xf32>
    %cst_17 = arith.constant 0.000000e+00 : f32
    %48 = vector.broadcast %cst_17 : f32 to vector<16x1xf32>
    %49 = arith.select %14, %48, %47 : vector<16x1xi1>, vector<16x1xf32>
    %50 = vector.broadcast %49 : vector<16x1xf32> to vector<16x128xf32>
    %51 = arith.mulf %50, %9 : vector<16x128xf32>
    %c0_18 = arith.constant 0 : index
    %c0_19 = arith.constant 0 : index
    %52 = vector.load %arg3[%c0_18, %c0_19] : memref<16x128xf32, #tpu.memory_space<vmem>>, vector<16x128xf32>
    tpu.vector_store %arg3[%c0_18, %c0_19], %51 {strides = array<i32>} : memref<16x128xf32, #tpu.memory_space<vmem>>, vector<16x128xf32>,
    return
  }
  func.func @transform_0(%arg0: i32) -> (i32, i32) {
    %c0_i32 = arith.constant 0 : i32
    %c0_i32_0 = arith.constant 0 : i32
    return %arg0, %c0_i32 : i32, i32
  }
  func.func @transform_1(%arg0: i32) -> (i32, i32) {
    %c0_i32 = arith.constant 0 : i32
    %c0_i32_0 = arith.constant 0 : i32
    %c0_i32_1 = arith.constant 0 : i32
    return %c0_i32, %c0_i32_0 : i32, i32
  }
  func.func @transform_2(%arg0: i32) -> (i32, i32) {
    %c0_i32 = arith.constant 0 : i32
    %c0_i32_0 = arith.constant 0 : i32
    return %arg0, %c0_i32 : i32, i32
  }
}

</mosaic_0001>

<llo_original>
// kernel: mobius_layer.1
$region0: #{mobius_layer.1}
  #allocation0 [shape = 'u32[]', space=smem, size = 0x4, offset = 0x4, fixed_abs, tag = 'smem constant byte address 0x4 - core index']
  #allocation1 [shape = 'u32[144,128]{1,0:T(1,128)}', space=vmem, size = 0x12000, scoped, tag = 'internal scratch']
  %s0 = inlined_call_operand.vmem [shape: f32[64,32], index: 0, kind: input, shape index: {}]
  %s1 = inlined_call_operand.vmem [shape: f32[32,128], index: 1, kind: input, shape index: {}]
  %s2 = inlined_call_operand.vmem [shape: f32[64,128], index: 2, kind: output, shape index: {}]
  %s3 = sld [smem:[#allocation0]]
  $region41: #{mobius_layer.1} parent=0
    _
  %s5 = ssub.s32 1, %s3
  %s6 = scalar_select 0, %s5, %s3
  loop: start=0, step=1, limit=6
  $region2: #{mobius_layer.1} parent=0 // loop_pre_header
    _
  $region3: #{mobius_layer.1} parent=0 // loop_header
    %s8 = sphi 0, %s12
    %p9 = scmp.ge.s32.totalorder %s8, 6
    %s18 = sphi 0, %s20
    %s21 = sphi 0, %s18
    %s22 = sphi 0, %s21
    %s38 = sphi 0, %s22
    %s42 = sphi 0, %s42
    %s44 = sphi 0, %s42
    %s45 = sphi 0, %s44
    %s59 = sphi 0, %s45
    %s65 = sphi 0, %s67
    %s68 = sphi 0, %s65
    %s69 = sphi 0, %s68
    %s85 = sphi 0, %s69
  $region4: #{mobius_layer.1} parent=0 // loop_header_branch
    %11 = sbr.rel (%p9) target = $region8
  $region5: #{mobius_layer.1} parent=0 // loop_body
    %s13 = ssub.s32 %s8, 1
    %s14 = ssub.s32 %s8, 2
    %s15 = sadd.s32 %s8, 1
    %s16 = ssub.s32 %s8, %s15
    %p17 = scmp.eq.s32.totalorder %s16, 0
    %s19 = sadd.s32 %s18, 1
    %s20 = scalar_select %p17, %s18, %s19
    %p23 = pneg %p17
    %p24 = scmp.eq.s32.totalorder %s8, 3
    %p25 = por %p23, %p24
    %p26 = scmp.ne.s32.totalorder %s18, %s21
    %p27 = scmp.eq.s32.totalorder %s8, 0
    %p28 = por %p26, %p27
    %p29 = scmp.ne.s32.totalorder %s18, %s21
    %p30 = scmp.eq.s32.totalorder %s13, 3
    %p31 = por %p29, %p30
    %p32 = scmp.ne.s32.totalorder %s21, %s22
    %p33 = scmp.eq.s32.totalorder %s13, 0
    %p34 = por %p32, %p33
    %p35 = scmp.ne.s32.totalorder %s21, %s22
    %p36 = scmp.eq.s32.totalorder %s14, 3
    %p37 = por %p35, %p36
    %p39 = scmp.ne.s32.totalorder %s22, %s38
    %p40 = scmp.eq.s32.totalorder %s14, 0
    %p41 = por %p39, %p40
    %s43 = sadd.s32 %s42, 1
    %p46 = scmp.eq.s32.totalorder %s8, 3
    %p47 = scmp.ne.s32.totalorder %s42, %s44
    %p48 = scmp.eq.s32.totalorder %s8, 0
    %p49 = por %p47, %p48
    %p50 = scmp.ne.s32.totalorder %s42, %s44
    %p51 = scmp.eq.s32.totalorder %s13, 3
    %p52 = por %p50, %p51
    %p53 = scmp.ne.s32.totalorder %s44, %s45
    %p54 = scmp.eq.s32.totalorder %s13, 0
    %p55 = por %p53, %p54
    %p56 = scmp.ne.s32.totalorder %s44, %s45
    %p57 = scmp.eq.s32.totalorder %s14, 3
    %p58 = por %p56, %p57
    %p60 = scmp.ne.s32.totalorder %s45, %s59
    %p61 = scmp.eq.s32.totalorder %s14, 0
    %p62 = por %p60, %p61
    %s63 = ssub.s32 %s8, %s15
    %p64 = scmp.eq.s32.totalorder %s63, 0
    %s66 = sadd.s32 %s65, 1
    %s67 = scalar_select %p64, %s65, %s66
    %p70 = pneg %p64
    %p71 = scmp.eq.s32.totalorder %s8, 3
    %p72 = por %p70, %p71
    %p73 = scmp.ne.s32.totalorder %s65, %s68
    %p74 = scmp.eq.s32.totalorder %s8, 0
    %p75 = por %p73, %p74
    %p76 = scmp.ne.s32.totalorder %s65, %s68
    %p77 = scmp.eq.s32.totalorder %s13, 3
    %p78 = por %p76, %p77
    %p79 = scmp.ne.s32.totalorder %s68, %s69
    %p80 = scmp.eq.s32.totalorder %s13, 0
    %p81 = por %p79, %p80
    %p82 = scmp.ne.s32.totalorder %s68, %s69
    %p83 = scmp.eq.s32.totalorder %s14, 3
    %p84 = por %p82, %p83
    %p86 = scmp.ne.s32.totalorder %s69, %s85
    %p87 = scmp.eq.s32.totalorder %s14, 0
    %p88 = por %p86, %p87
    %p89 = scmp.le.s32.totalorder 1, %s8
    %p90 = scmp.lt.s32.totalorder %s8, 5
    %p91 = pnand %p89, %p90
    %p92 = pneg %p91
    // Predicated region
    $region9: #{mobius_layer.1} parent=5 // pred_check
      _
    $region10: #{mobius_layer.1} parent=5 // pred_check_branch
      %94 = sbr.rel (%p91) target = $region12
    $region11: #{mobius_layer.1} parent=5 // pred_region
      %s95 = ssub.s32 %s8, 1
      // Predicated region
      $region13: #{mobius_layer.1} parent=11 // pred_check
        %p96 = pneg %p55
      $region14: #{mobius_layer.1} parent=11 // pred_check_branch
        %98 = sbr.rel (%p96) target = $region16
      $region15: #{mobius_layer.1} parent=11 // pred_region
        _
      $region16: #{mobius_layer.1} parent=11 // pred_fallthru
        _
    $region12: #{mobius_layer.1} parent=5 // pred_fallthru
      _
    %p99 = scmp.lt.s32.totalorder %s8, 4
    // Predicated region
    $region17: #{mobius_layer.1} parent=5 // pred_check
      %p100 = pneg %p99
    $region18: #{mobius_layer.1} parent=5 // pred_check_branch
      %102 = sbr.rel (%p100) target = $region20
    $region19: #{mobius_layer.1} parent=5 // pred_region
      // Predicated region
      $region21: #{mobius_layer.1} parent=19 // pred_check
        %p103 = pneg %p28
      $region22: #{mobius_layer.1} parent=19 // pred_check_branch
        %105 = sbr.rel (%p103) target = $region24
      $region23: #{mobius_layer.1} parent=19 // pred_region
        %s106 = smul.u32 2, %s8
        %p107 = scmp.lt.s32.totalorder %s106, 7
        %s108 = scalar_select %p107, %s106, 7
        %s109 = smul.addr %s108, 8
        %s110 = scalar_lea.vmem %s0, %s109
        %s111 = smul.u32 2, %s8
      $region24: #{mobius_layer.1} parent=19 // pred_fallthru
        _
    $region20: #{mobius_layer.1} parent=5 // pred_fallthru
      _
    %p112 = scmp.le.s32.totalorder 1, %s8
    %p113 = scmp.lt.s32.totalorder %s8, 5
    %p114 = pnand %p112, %p113
    %p115 = pneg %p114
    // Predicated region
    $region25: #{mobius_layer.1} parent=5 // pred_check
      _
    $region26: #{mobius_layer.1} parent=5 // pred_check_branch
      %117 = sbr.rel (%p114) target = $region28
    $region27: #{mobius_layer.1} parent=5 // pred_region
      %s118 = ssub.s32 %s8, 1
      %s119 = smul.u32 2, %s13
      %p120 = scmp.lt.s32.totalorder %s119, 7
      %s121 = scalar_select %p120, %s119, 7
      %s122 = smul.addr %s121, 8
      %s123 = scalar_lea.vmem %s0, %s122
      %p124 = pneg %p34
      %p125 = pneg %p31
      %p126 = pneg %p55
      %p127 = pneg %p52
      %p128 = pneg %p81
      %p129 = pneg %p78
      %s130 = smul.u32 2, %s13
      %p131 = scmp.lt.s32.totalorder %s130, 7
      %s132 = scalar_select %p131, %s130, 7
      %s133 = smul.addr %s132, 8
      %s134 = scalar_lea.vmem %s2, %s133
      %s135 = smul.u32 2, %s13
      %p136 = scmp.lt.s32.totalorder %s135, 7
      %s137 = scalar_select %p136, %s135, 7
      %s138 = smul.addr %s137, 8
      %s139 = scalar_lea.vmem %s0, %s138
      %s140 = smul.u32 2, %s13
      %s141 = smul.u32 2, %s13
      %p142 = scmp.lt.s32.totalorder %s141, 7
      %s143 = scalar_select %p142, %s141, 7
      %s144 = smul.addr %s143, 8
      %s145 = scalar_lea.vmem %s2, %s144
      %s146 = smul.u32 2, %s13
      %v147 = vld [vmem:[%s139] sm:$0xff]
      %v148 = vld [vmem:[%s139 + $0x8] sm:$0xff]
      %v149 = vld [vmem:[%s1] sm:$0xff]
      %v150 = vld [vmem:[%s1 + $0x8] sm:$0xff]
      %v151 = vld [vmem:[%s1 + $0x10] sm:$0xff]
      %v152 = vld [vmem:[%s1 + $0x18] sm:$0xff]
      %v153 = vmul.f32 %v147, %v147
      %v154 = vmul.f32 %v148, %v148
      %vm155 = vcmask 261120
      %v156 = vsel %vm155, %v153, 0.0
      %157 = vadd.xlane.f32.xlu0 %v156
      %v158 = vpop.xlane.xlu0 %157
      %v159 = vsel %vm155, %v154, 0.0
      %160 = vadd.xlane.f32.xlu0 %v159
      %v161 = vpop.xlane.xlu0 %160
      %v162 = vmax.f32 %v158, 1e-30
      %v163 = vmax.f32 %v161, 1e-30
      %v164 = vrsqrt.pop %v162
      %v165 = vrsqrt.pop %v163
      %v166 = vmul.f32 %v162, %v164
      %v167 = vmul.f32 %v163, %v165
      %v169 = vsel %vm155, %v147, 0
      %v172 = vsel %vm155, %v148, 0
      %174 = vmatprep.subr.mxu0 0.0
      %175 = vmatpush1.msra.mxu0 0.0
      %176 = vmatprep.subr.mxu0 0.0
      %177 = vmatpush1.msra.mxu0 0.0
      %178 = vmatprep.subr.mxu0 0.0
      %179 = vmatpush1.msra.mxu0 0.0
      %180 = vmatprep.subr.mxu0 0.0
      %181 = vmatpush1.msra.mxu0 0.0
      %182 = vmatprep.subr.mxu0 0.0
      %183 = vmatpush1.msra.mxu0 0.0
      %184 = vmatprep.subr.mxu0 0.0
      %185 = vmatpush1.msra.mxu0 0.0
      %186 = vmatprep.subr.mxu0 0.0
      %187 = vmatpush1.msra.mxu0 0.0
      %188 = vmatprep.subr.mxu0 0.0
      %189 = vmatpush1.msra.mxu0 0.0
      %190 = vmatprep.subr.mxu0 0.0
      %191 = vmatpush1.msra.mxu0 0.0
      %192 = vmatprep.subr.mxu0 0.0
      %193 = vmatpush1.msra.mxu0 0.0
      %194 = vmatprep.subr.mxu0 0.0
      %195 = vmatpush1.msra.mxu0 0.0
      %196 = vmatprep.subr.mxu0 0.0
      %197 = vmatpush1.msra.mxu0 0.0
      %198 = vmatprep.subr.mxu0 0.0
      %199 = vmatpush1.msra.mxu0 %v152
      %200 = vmatprep.subr.mxu0 0.0
      %201 = vmatpush1.msra.mxu0 %v151
      %202 = vmatprep.subr.mxu0 0.0
      %203 = vmatpush1.msra.mxu0 %v150
      %204 = vmatprep.subr.mxu0 0.0
      %205 = vmatpush1.msra.mxu0 %v149
      %206 = vmatprep.subr.mxu0 0.0
      %207 = vmatpush2.msra.mxu0 0.0
      %208 = vmatprep.subr.mxu0 0.0
      %209 = vmatpush2.msra.mxu0 0.0
      %210 = vmatprep.subr.mxu0 0.0
      %211 = vmatpush2.msra.mxu0 0.0
      %212 = vmatprep.subr.mxu0 0.0
      %213 = vmatpush2.msra.mxu0 0.0
      %214 = vmatprep.subr.mxu0 0.0
      %215 = vmatpush2.msra.mxu0 0.0
      %216 = vmatprep.subr.mxu0 0.0
      %217 = vmatpush2.msra.mxu0 0.0
      %218 = vmatprep.subr.mxu0 0.0
      %219 = vmatpush2.msra.mxu0 0.0
      %220 = vmatprep.subr.mxu0 0.0
      %221 = vmatpush2.msra.mxu0 0.0
      %222 = vmatprep.subr.mxu0 0.0
      %223 = vmatpush2.msra.mxu0 0.0
      %224 = vmatprep.subr.mxu0 0.0
      %225 = vmatpush2.msra.mxu0 0.0
      %226 = vmatprep.subr.mxu0 0.0
      %227 = vmatpush2.msra.mxu0 0.0
      %228 = vmatprep.subr.mxu0 0.0
      %229 = vmatpush2.msra.mxu0 0.0
      %230 = vmatprep.subr.mxu0 0.0
      %231 = vmatpush2.msra.mxu0 0.0
      %232 = vmatprep.subr.mxu0 0.0
      %233 = vmatpush2.msra.mxu0 0.0
      %234 = vmatprep.subr.mxu0 0.0
      %235 = vmatpush2.msra.mxu0 0.0
      %236 = vmatprep.subr.mxu0 0.0
      %237 = vmatpush2.msra.mxu0 0.0
      %238 = vmatprep.mubr.f32.mxu0 0.0
      %239 = vmatmul.mubr.f32.gmra.mxu0 %v169
      %v240 = vpop.f32.mrf.mxu0
      %v241 = vadd.f32 0.0, %v240
      %v242 = vpop.f32.mrf.mxu0
      %243 = vmatprep.mubr.f32.mxu0 0.0
      %244 = vmatmul.mubr.f32.gmra.mxu0 %v172
      %v245 = vpop.f32.mrf.mxu0
      %v246 = vadd.f32 0.0, %v245
      %v247 = vpop.f32.mrf.mxu0
      %248 = vdwg.mxu0
      %v249 = vmul.f32 %v241, %v241
      %v250 = vmul.f32 %v246, %v246
      %251 = vadd.xlane.f32.xlu0 %v249
      %v252 = vpop.xlane.xlu0 %251
      %253 = vadd.xlane.f32.xlu0 %v250
      %v254 = vpop.xlane.xlu0 %253
      %vm255 = vcmp.eq.f32.partialorder %v252, 0.0
      %vm256 = vcmp.eq.f32.partialorder %v254, 0.0
      %v257 = vmax.f32 %v252, 1e-30
      %v258 = vmax.f32 %v254, 1e-30
      %v259 = vrsqrt.pop %v257
      %v260 = vrsqrt.pop %v258
      %v261 = vmul.f32 %v257, %v259
      %v262 = vmul.f32 %v258, %v260
      %v263 = vmax.f32 %v166, -0.9999999
      %v264 = vmax.f32 %v167, -0.9999999
      %v265 = vmin.f32 %v263, 0.9999999
      %v266 = vmin.f32 %v264, 0.9999999
      %v267 = vadd.f32 %v265, 1.0
      %v268 = vlog2.pop %v267
      %v269 = vmul.f32 %v268, 0.6931472
      %v270 = vmul.f32 -0.5, %v265
      %v271 = vadd.f32 %v270, 1.0
      %v272 = vmul.f32 %v271, %v265
      %v273 = vand.u32 2147483647, %v265
      %vm274 = vcmp.lt.f32.partialorder %v273, 0.0004427343
      %v275 = vsel %vm274, %v272, %v269
      %v276 = vadd.f32 %v266, 1.0
      %v277 = vlog2.pop %v276
      %v278 = vmul.f32 %v277, 0.6931472
      %v279 = vmul.f32 -0.5, %v266
      %v280 = vadd.f32 %v279, 1.0
      %v281 = vmul.f32 %v280, %v266
      %v282 = vand.u32 2147483647, %v266
      %vm283 = vcmp.lt.f32.partialorder %v282, 0.0004427343
      %v284 = vsel %vm283, %v281, %v278
      %v285 = vsub.f32 0.0, %v265
      %v286 = vsub.f32 0.0, %v266
      %v287 = vadd.f32 %v285, 1.0
      %v288 = vlog2.pop %v287
      %v289 = vmul.f32 %v288, 0.6931472
      %v290 = vmul.f32 -0.5, %v285
      %v291 = vadd.f32 %v290, 1.0
      %v292 = vmul.f32 %v291, %v285
      %v293 = vand.u32 2147483647, %v285
      %vm294 = vcmp.lt.f32.partialorder %v293, 0.0004427343
      %v295 = vsel %vm294, %v292, %v289
      %v296 = vadd.f32 %v286, 1.0
      %v297 = vlog2.pop %v296
      %v298 = vmul.f32 %v297, 0.6931472
      %v299 = vmul.f32 -0.5, %v286
      %v300 = vadd.f32 %v299, 1.0
      %v301 = vmul.f32 %v300, %v286
      %v302 = vand.u32 2147483647, %v286
      %vm303 = vcmp.lt.f32.partialorder %v302, 0.0004427343
      %v304 = vsel %vm303, %v301, %v298
      %v305 = vsub.f32 %v275, %v295
      %v306 = vsub.f32 %v284, %v304
      %v307 = vmul.f32 %v305, 0.5
      %v308 = vmul.f32 %v306, 0.5
      %v309 = vmul.f32 %v261, %v164
      %v310 = vmul.f32 %v262, %v165
      %v311 = vmul.f32 %v309, %v307
      %v312 = vmul.f32 %v310, %v308
      %v313 = vtanh.pop %v311
      %v314 = vtanh.pop %v312
      %v315 = vmul.f32 %v313, %v259
      %v316 = vmul.f32 %v314, %v260
      %v317 = vmul.f32 %v315, %v315
      %v318 = vmul.f32 %v316, %v316
      %v319 = vmul.f32 %v317, %v257
      %v320 = vmul.f32 %v318, %v258
      %v321 = vmax.f32 %v319, 1e-30
      %v322 = vmax.f32 %v320, 1e-30
      %v323 = vrsqrt.pop %v321
      %v324 = vrsqrt.pop %v322
      %v325 = vmul.f32 %v323, 0.996
      %v326 = vmul.f32 %v324, 0.996
      %v327 = vmin.f32 %v325, 1.0
      %v328 = vmin.f32 %v326, 1.0
      %v329 = vmul.f32 %v315, %v327
      %v330 = vmul.f32 %v316, %v328
      %v331 = vsel %vm255, 0.0, %v329
      %v332 = vsel %vm256, 0.0, %v330
      %v333 = vmul.f32 %v331, %v241
      %v334 = vmul.f32 %v332, %v246
      %335 = vst [vmem:[%s145] sm:$0xff] %v333
      %336 = vst [vmem:[%s145 + $0x8] sm:$0xff] %v334
      %s337 = smul.u32 2, %s13
      %p338 = scmp.lt.s32.totalorder %s337, 7
      %s339 = scalar_select %p338, %s337, 7
      %s340 = smul.addr %s339, 8
      %s341 = scalar_lea.vmem %s2, %s340
      // Predicated region
      $region29: #{mobius_layer.1} parent=27 // pred_check
        %p342 = pneg %p78
      $region30: #{mobius_layer.1} parent=27 // pred_check_branch
        %344 = sbr.rel (%p342) target = $region32
      $region31: #{mobius_layer.1} parent=27 // pred_region
        %s345 = smul.u32 2, %s13
      $region32: #{mobius_layer.1} parent=27 // pred_fallthru
        _
    $region28: #{mobius_layer.1} parent=5 // pred_fallthru
      _
    %p346 = scmp.le.s32.totalorder 2, %s8
    // Predicated region
    $region33: #{mobius_layer.1} parent=5 // pred_check
      %p347 = pneg %p346
    $region34: #{mobius_layer.1} parent=5 // pred_check_branch
      %349 = sbr.rel (%p347) target = $region36
    $region35: #{mobius_layer.1} parent=5 // pred_region
      %s350 = ssub.s32 %s8, 2
      // Predicated region
      $region37: #{mobius_layer.1} parent=35 // pred_check
        %p351 = pneg %p84
      $region38: #{mobius_layer.1} parent=35 // pred_check_branch
        %353 = sbr.rel (%p351) target = $region40
      $region39: #{mobius_layer.1} parent=35 // pred_region
        %s354 = smul.u32 2, %s14
        %p355 = scmp.lt.s32.totalorder %s354, 7
        %s356 = scalar_select %p355, %s354, 7
        %s357 = smul.addr %s356, 8
        %s358 = scalar_lea.vmem %s2, %s357
      $region40: #{mobius_layer.1} parent=35 // pred_fallthru
        _
    $region36: #{mobius_layer.1} parent=5 // pred_fallthru
      _
  $region6: #{mobius_layer.1} parent=0 // loop_footer
    %s12 = sadd.s32 1, %s8
  $region7: #{mobius_layer.1} parent=0 // loop_footer_branch
    %7 = sbr.rel target = $region3
  $region8: #{mobius_layer.1} parent=0 // loop_exit
    _

</llo_original>
